<compile_context>
chip_gen: v7x
topology: tpu7x:2x2x1
jax: 0.10.0
libtpu: 0.0.40
codegen_flags: <defaults>
</compile_context>

<pallas_src>
import functools
import math

import jax
import jax.numpy as jnp
import numpy as np
from jax.experimental import pallas as pl
from jax.experimental.pallas import tpu as pltpu


# --------------------- PE table (built once, in the wrapper) ------------------
def make_pe_table(T, E, dtype=jnp.float32):
    """Sinusoidal table pe[n, c] matching run_once(), first E columns only.

    One transcendental per element: cos(a) == sin(a + pi/2).
    """
    d_model = ((E + 1) // 2) * 2
    pos = jnp.arange(T, dtype=jnp.float32)[:, None]                 # (T, 1)
    ch = jnp.arange(E, dtype=jnp.int32)[None, :]                    # (1, E)
    is_odd = (ch % 2).astype(jnp.float32)
    exponent = (ch - (ch % 2)).astype(jnp.float32) * (-math.log(10000.0) / d_model)
    angle = pos * jnp.exp(exponent) + is_odd * (math.pi / 2.0)
    return jnp.sin(angle).astype(dtype)


# ----------------------------- tile sizing (bytes-based) ----------------------
def _pick_bb(B, per_row_bytes, target_bytes):
    """Batch rows per block for the 2-D (bb, tf) add layout.
    Must be a multiple of 8 or equal to B (second-to-last block-dim rule)."""
    if B <= 8:
        return B
    want = max(1, target_bytes // max(per_row_bytes, 1))
    if want >= B:
        return B
    return max(8, (want // 8) * 8)


def _pick_tf(F, bb, itemsize, target_bytes):
    """Flat-axis tile: multiple of 128 (lane-dense stores) or the full axis."""
    want = max(128, target_bytes // max(bb * itemsize, 1))
    if want >= F:
        return F
    return (want // 128) * 128


def _pick_cat_tiles(B, T, E, itemsize, target_bytes):
    """(bb, tq) for (bb, tq, E) blocks: tq multiple of 8 (or == T); bb is a
    plain leading dim so any size is legal."""
    row_bytes = E * itemsize
    want_tq = max(8, target_bytes // max(row_bytes, 1))
    tq = T if want_tq >= T else (want_tq // 8) * 8
    want_bb = max(1, target_bytes // max(tq * row_bytes, 1))
    bb = min(B, want_bb)
    return bb, tq


# ----------------------------- mode == 'add' ----------------------------------
def pe_add_kernel(pe_ref, thr_ref, x_ref, o_ref):
    # pe_ref: (1, tf)   thr_ref: (bb, 1) int32   x_ref / o_ref: (bb, tf)
    tf = x_ref.shape[1]
    start = pl.program_id(0) * tf
    col = start + jax.lax.broadcasted_iota(jnp.int32, (1, tf), 1)    # flat index
    mask = col < thr_ref[...]                                        # (bb, tf)
    pe = jnp.where(mask, pe_ref[...], jnp.zeros((), pe_ref.dtype))
    o_ref[...] = (x_ref[...] + pe).astype(o_ref.dtype)


def positional_encoding_add(x, num_nodes, *, target_block_bytes=1 << 20):
    B, T, E = x.shape
    F = T * E
    itemsize = jnp.dtype(x.dtype).itemsize

    pe_flat = make_pe_table(T, E, x.dtype).reshape(1, F)             # lane-dense
    x_flat = x.reshape(B, F)                                         # free reshape
    # Row n active iff n <= num_nodes[b]  <=>  flat index < (num_nodes[b]+1)*E.
    thr = ((num_nodes.astype(jnp.int32) + 1) * E).reshape(B, 1)

    bb = _pick_bb(B, F * itemsize, target_block_bytes)
    tf = _pick_tf(F, bb, itemsize, target_block_bytes)
    grid = (pl.cdiv(F, tf), pl.cdiv(B, bb))   # batch innermost: pe block stays resident

    out_flat = pl.pallas_call(
        pe_add_kernel,
        out_shape=jax.ShapeDtypeStruct((B, F), x.dtype),
        grid=grid,
        in_specs=[
            pl.BlockSpec((1, tf), lambda t, b: (0, t)),              # pe (batch-invariant)
            pl.BlockSpec((bb, 1), lambda t, b: (b, 0)),              # per-row threshold
            pl.BlockSpec((bb, tf), lambda t, b: (b, t)),             # x
        ],
        out_specs=pl.BlockSpec((bb, tf), lambda t, b: (b, t)),
        compiler_params=pltpu.CompilerParams(
            dimension_semantics=("parallel", "parallel")),
    )(pe_flat, thr, x_flat)
    return out_flat.reshape(B, T, E)


# ----------------------------- mode == 'cat' ----------------------------------
def pe_cat_kernel(pe_ref, nn_ref, x_ref, w_ref, b_ref, o_ref, *, cat_dim):
    # pe_ref: (1, tq, E)  nn_ref: (bb, 1, 1)  x_ref/o_ref: (bb, tq, E)
    # w_ref: (E, E) padded  b_ref: (1, E) padded
    bb, tq, E = x_ref.shape
    x = x_ref[...]
    # Lane-dense padded Linear: first cat_dim output columns are zero and get
    # replaced by pe via the column select -> one MXU matmul, no lane concat.
    reproj = jnp.dot(x.reshape(bb * tq, E), w_ref[...],
                     preferred_element_type=jnp.float32).reshape(bb, tq, E)
    reproj = reproj + b_ref[...]
    col = jax.lax.broadcasted_iota(jnp.int32, (1, 1, E), 2)
    new = jnp.where(col < cat_dim, pe_ref[...], reproj)              # (bb, tq, E)
    rows = (pl.program_id(0) * tq
            + jax.lax.broadcasted_iota(jnp.int32, (1, tq, 1), 1))
    mask = rows <= nn_ref[...]                                       # (bb, tq, 1)
    o_ref[...] = jnp.where(mask, new, x).astype(o_ref.dtype)


def positional_encoding_cat(x, num_nodes, w, bias, cat_dim=8, *,
                            target_block_bytes=1 << 20):
    # w: (E, E - cat_dim)   (already transposed from PyTorch's (out, in) layout)
    B, T, E = x.shape
    E_out = E - cat_dim
    assert w.shape == (E, E_out) and bias.shape == (E_out,)
    itemsize = jnp.dtype(x.dtype).itemsize

    pe = make_pe_table(T, E, x.dtype).reshape(1, T, E)
    nn = num_nodes.astype(jnp.int32).reshape(B, 1, 1)
    # Pad the Linear to a lane-dense (E, E) output; keep params in x.dtype,
    # accumulate in f32 on the MXU.
    w_pad = jnp.concatenate([jnp.zeros((E, cat_dim), w.dtype), w],
                            axis=1).astype(x.dtype)
    b_pad = jnp.concatenate([jnp.zeros((cat_dim,), bias.dtype),
                             bias]).reshape(1, E).astype(x.dtype)

    bb, tq = _pick_cat_tiles(B, T, E, itemsize, target_block_bytes)
    grid = (pl.cdiv(T, tq), pl.cdiv(B, bb))

    return pl.pallas_call(
        functools.partial(pe_cat_kernel, cat_dim=cat_dim),
        out_shape=jax.ShapeDtypeStruct((B, T, E), x.dtype),
        grid=grid,
        in_specs=[
            pl.BlockSpec((1, tq, E), lambda t, b: (0, t, 0)),        # pe (batch-invariant)
            pl.BlockSpec((bb, 1, 1), lambda t, b: (b, 0, 0)),        # num_nodes per row
            pl.BlockSpec((bb, tq, E), lambda t, b: (b, t, 0)),       # x
            pl.BlockSpec((E, E), lambda t, b: (0, 0)),               # padded weight
            pl.BlockSpec((1, E), lambda t, b: (0, 0)),               # padded bias
        ],
        out_specs=pl.BlockSpec((bb, tq, E), lambda t, b: (b, t, 0)),
        compiler_params=pltpu.CompilerParams(
            dimension_semantics=("parallel", "parallel")),
    )(pe, nn, x, w_pad, b_pad)


# ----------------------------- reference (numpy) -------------------------------
def _ref_pe(T, E):
    d_model = ((E + 1) // 2) * 2
    pos = np.arange(T, dtype=np.float64)[:, None]
    dt = np.exp(np.arange(0, d_model, 2, dtype=np.float64) *
                (-math.log(10000.0) / d_model))
    pe = np.zeros((T, d_model), dtype=np.float64)
    pe[:, 0::2] = np.sin(pos * dt)
    pe[:, 1::2] = np.cos(pos * dt)
    return pe[:, :E].astype(np.float32)


def ref_add(x, num_nodes):
    B, T, E = x.shape
    pe = _ref_pe(T, E)
    mask = np.arange(T)[None, :] <= np.asarray(num_nodes)[:, None]   # (B, T)
    return np.asarray(x) + mask[:, :, None].astype(np.float32) * pe[None]


def ref_cat(x, num_nodes, w, bias, cat_dim):
    x = np.asarray(x)
    B, T, E = x.shape
    pe = _ref_pe(T, E)
    out = x.copy()
    reproj = x @ np.asarray(w) + np.asarray(bias)                    # (B, T, E-cat_dim)
    for b in range(B):
        for n in range(T):
            if n <= int(num_nodes[b]):
                out[b, n, :cat_dim] = pe[n, :cat_dim]
                out[b, n, cat_dim:] = reproj[b, n]
    return out


if __name__ == "__main__":
    B, T, E = 2, 8, 32
    cat_dim = 8

    key = jax.random.PRNGKey(0)
    kx, kw, kb = jax.random.split(key, 3)
    x = jax.random.normal(kx, (B, T, E), dtype=jnp.float32)
    num_nodes = jnp.array([3, 6], dtype=jnp.int32)

    # Deterministic Linear(E, E - cat_dim) params (nn.Linear-style uniform init).
    bound = 1.0 / math.sqrt(E)
    w = jax.random.uniform(kw, (E, E - cat_dim), jnp.float32, -bound, bound)
    bias = jax.random.uniform(kb, (E - cat_dim,), jnp.float32, -bound, bound)

    out_add = jax.block_until_ready(positional_encoding_add(x, num_nodes))
    out_cat = jax.block_until_ready(
        positional_encoding_cat(x, num_nodes, w, bias, cat_dim))

    np.testing.assert_allclose(np.asarray(out_add), ref_add(x, num_nodes),
                               atol=1e-5, rtol=1e-5)
    np.testing.assert_allclose(np.asarray(out_cat),
                               ref_cat(x, num_nodes, w, bias, cat_dim),
                               atol=1e-5, rtol=1e-5)

    print("KERNEL_OK")
</pallas_src>

<mosaic_0001>
module attributes {stable_mosaic.version = 11 : i64} {
  func.func @pe_add_kernel(%arg0: i32, %arg1: i32, %arg2: memref<1x256xf32, #tpu.memory_space<vmem>>, %arg3: memref<2x1xi32, #tpu.memory_space<vmem>>, %arg4: memref<2x256xf32, #tpu.memory_space<vmem>>, %arg5: memref<2x256xf32, #tpu.memory_space<vmem>>) attributes {dimension_semantics = [#tpu.dimension_semantics<parallel>, #tpu.dimension_semantics<parallel>], iteration_bounds = array<i64: 1, 1>, scalar_prefetch = 0 : i64, scratch_operands = 0 : i64, tpu.core_type = #tpu.core_type<tc>, window_params = [{transform_indices = @transform_0, window_bounds = array<i64: 1, 256>}, {transform_indices = @transform_1, window_bounds = array<i64: 2, 1>}, {transform_indices = @transform_2, window_bounds = array<i64: 2, 256>}, {transform_indices = @transform_3, window_bounds = array<i64: 2, 256>}]} {
    %c256_i32 = arith.constant 256 : i32
    %0 = arith.muli %arg0, %c256_i32 : i32
    %1 = tpu.iota {dimensions = array<i32: 1>} : vector<1x256xi32>
    %2 = vector.broadcast %0 : i32 to vector<1x256xi32>
    %3 = arith.addi %2, %1 : vector<1x256xi32>
    %c0 = arith.constant 0 : index
    %c0_0 = arith.constant 0 : index
    %4 = vector.load %arg3[%c0, %c0_0] : memref<2x1xi32, #tpu.memory_space<vmem>>, vector<2x1xi32>
    %5 = vector.broadcast %3 : vector<1x256xi32> to vector<2x256xi32>
    %6 = vector.broadcast %4 : vector<2x1xi32> to vector<2x256xi32>
    %7 = arith.cmpi slt, %5, %6 : vector<2x256xi32>
    %c0_1 = arith.constant 0 : index
    %c0_2 = arith.constant 0 : index
    %8 = vector.load %arg2[%c0_1, %c0_2] : memref<1x256xf32, #tpu.memory_space<vmem>>, vector<1x256xf32>
    %cst = arith.constant 0.000000e+00 : f32
    %9 = vector.shape_cast %8 : vector<1x256xf32> to vector<1x256xf32>
    %10 = vector.broadcast %9 : vector<1x256xf32> to vector<2x256xf32>
    %11 = vector.broadcast %cst : f32 to vector<2x256xf32>
    %12 = arith.select %7, %10, %11 : vector<2x256xi1>, vector<2x256xf32>
    %c0_3 = arith.constant 0 : index
    %c0_4 = arith.constant 0 : index
    %13 = vector.load %arg4[%c0_3, %c0_4] : memref<2x256xf32, #tpu.memory_space<vmem>>, vector<2x256xf32>
    %14 = arith.addf %13, %12 : vector<2x256xf32>
    %c0_5 = arith.constant 0 : index
    %c0_6 = arith.constant 0 : index
    %15 = vector.load %arg5[%c0_5, %c0_6] : memref<2x256xf32, #tpu.memory_space<vmem>>, vector<2x256xf32>
    tpu.vector_store %arg5[%c0_5, %c0_6], %14 {strides = array<i32>} : memref<2x256xf32, #tpu.memory_space<vmem>>, vector<2x256xf32>,
    return
  }
  func.func @transform_0(%arg0: i32, %arg1: i32) -> (i32, i32) {
    %c0_i32 = arith.constant 0 : i32
    %c0_i32_0 = arith.constant 0 : i32
    return %c0_i32, %arg0 : i32, i32
  }
  func.func @transform_1(%arg0: i32, %arg1: i32) -> (i32, i32) {
    %c0_i32 = arith.constant 0 : i32
    %c0_i32_0 = arith.constant 0 : i32
    return %arg1, %c0_i32 : i32, i32
  }
  func.func @transform_2(%arg0: i32, %arg1: i32) -> (i32, i32) {
    %c0_i32 = arith.constant 0 : i32
    return %arg1, %arg0 : i32, i32
  }
  func.func @transform_3(%arg0: i32, %arg1: i32) -> (i32, i32) {
    %c0_i32 = arith.constant 0 : i32
    return %arg1, %arg0 : i32, i32
  }
}

</mosaic_0001>

<llo_original>
// kernel: tpu_custom_call.1
$region0: #{tpu_custom_call.1}
  #allocation0 [shape = 'u32[]', space=smem, size = 0x4, offset = 0x4, fixed_abs, tag = 'smem constant byte address 0x4 - core index']
  #allocation1 [shape = 'u32[144,128]{1,0:T(1,128)}', space=vmem, size = 0x12000, scoped, tag = 'internal scratch']
  %s0 = inlined_call_operand.vmem [shape: f32[1,256], index: 0, kind: input, shape index: {}]
  %s1 = inlined_call_operand.vmem [shape: s32[2,1], index: 1, kind: input, shape index: {}]
  %s2 = inlined_call_operand.vmem [shape: f32[2,256], index: 2, kind: input, shape index: {}]
  %s3 = inlined_call_operand.hbm [shape: f32[2,256], index: 3, kind: output, shape index: {}]
  %s4 = sld [smem:[#allocation0]]
  $region22: #{tpu_custom_call.1} parent=0
    _
  %s6 = ssub.s32 1, %s4
  %s7 = scalar_select 0, %s6, %s4
  $region1: #{tpu_custom_call.1} parent=0
    #allocation2 [shape = 'u8[2048]{0}', space=vmem, size = 0x800, scoped, tag = 'output window, operand 0, single buffered']
    #allocation3 [shape = 's32[1]{0}', space=sflag, size = 0x4, scoped, tag = 'scoped memory for tpu_custom_call.1']
    %8 = vsyncpa [#allocation3], 0
    // Predicated region
    $region2: #{tpu_custom_call.1} parent=1 // pred_check
      _
    $region3: #{tpu_custom_call.1} parent=1 // pred_check_branch
      %10 = sbr.rel (0) target = $region5
    $region4: #{tpu_custom_call.1} parent=1 // pred_region
      _
    $region5: #{tpu_custom_call.1} parent=1 // pred_fallthru
      _
    // Predicated region
    $region6: #{tpu_custom_call.1} parent=1 // pred_check
      _
    $region7: #{tpu_custom_call.1} parent=1 // pred_check_branch
      %12 = sbr.rel (0) target = $region9
    $region8: #{tpu_custom_call.1} parent=1 // pred_region
      _
    $region9: #{tpu_custom_call.1} parent=1 // pred_fallthru
      _
    // Predicated region
    $region10: #{tpu_custom_call.1} parent=1 // pred_check
      _
    $region11: #{tpu_custom_call.1} parent=1 // pred_check_branch
      %14 = sbr.rel (0) target = $region13
    $region12: #{tpu_custom_call.1} parent=1 // pred_region
      _
    $region13: #{tpu_custom_call.1} parent=1 // pred_fallthru
      _
    %s15 = smul.u32 0, 256
    %v16 = vlaneseq
    %v17 = vand.u32 %v16, 127
    %v18 = vadd.s32 %v17, 128
    %v19 = vstv %s15
    %v20 = vadd.s32 %v19, %v17
    %v21 = vadd.s32 %v19, %v18
    %v22 = vld [vmem:[%s1] sm:$0x3]
    %23 = vset.pattern.permute.xlu0 0
    %24 = vperm.xlu0 %23, %v22
    %v25 = vpop.permute.xlu0 %24
    %vm26 = vcmp.lt.s32.totalorder %v20, %v25
    %vm27 = vcmp.lt.s32.totalorder %v21, %v25
    %v28 = vld [vmem:[%s0] sm:$0x3]
    %v30 = vlaneseq
    %v31 = vshrl.u32 %v30, 7
    %v32 = vsub.s32 0, %v31
    %v33 = vrot.slane %v28, %v32
    %v34 = vlaneseq
    %v35 = vshrl.u32 %v34, 7
    %v36 = vsub.s32 1, %v35
    %v37 = vrot.slane %v28, %v36
    %v40 = vsel %vm26, %v33, 0.0
    %v41 = vsel %vm27, %v37, 0.0
    %v42 = vld [vmem:[%s2] sm:$0xf]
    %v45 = vcombine.low %v40, %v41
    %v47 = vunpack.c.l.s4 1983009808
    %v48 = vunpack.c.0.s8 %v47
    %v49 = vlaneseq
    %v50 = vshrl.u32 %v49, 7
    %v51 = vsub.s32 %v48, %v50
    %v52 = vrot.slane %v45, %v51
    %v54 = vadd.f32 %v42, %v52
    %55 = vst [vmem:[#allocation2] sm:$0xf] %v54
    // Predicated region
    $region14: #{tpu_custom_call.1} parent=1 // pred_check
      _
    $region15: #{tpu_custom_call.1} parent=1 // pred_check_branch
      %57 = sbr.rel (0) target = $region17
    $region16: #{tpu_custom_call.1} parent=1 // pred_region
      %s59 = ssub.s32 64, 64
      %60 = vsyncadd [#allocation3], %s59
      %s62 = sshll.u32 [#allocation2], 4
      %s63 = int_to_ptr.vmem [resolvable:$true] %s62
      %65 = dma.vmem_to_hbm [thread:$0]  %s63, 64, %s3, [#allocation3]
    $region17: #{tpu_custom_call.1} parent=1 // pred_fallthru
      _
    // Predicated region
    $region18: #{tpu_custom_call.1} parent=1 // pred_check
      _
    $region19: #{tpu_custom_call.1} parent=1 // pred_check_branch
      %67 = sbr.rel (0) target = $region21
    $region20: #{tpu_custom_call.1} parent=1 // pred_region
      %68 = dma.done [#allocation3], 64
    $region21: #{tpu_custom_call.1} parent=1 // pred_fallthru
      _
    %69 = vsyncpa [#allocation3], 1

</llo_original>
